<compile_context>
chip_gen: v6e
topology: v6e:2x2x1
jax: 0.10.0
libtpu: 0.0.40
codegen_flags: <defaults>
</compile_context>

<pallas_src>
import functools

import numpy as np
import jax
import jax.numpy as jnp
from jax.experimental import pallas as pl
from jax.experimental.pallas import tpu as pltpu


def _round_up(x: int, m: int) -> int:
    return (x + m - 1) // m * m


def _choose_hw_tiling(hw: int, max_tile: int = 8192):
    """Pick a lane-dense tile (multiple of 128) and the padded HW extent."""
    hw128 = _round_up(hw, 128)
    if hw128 <= max_tile:
        return hw128, hw128                      # single tile per batch element
    for t in (8192, 4096, 2048):                 # large, overhead-amortizing tiles
        if hw % t == 0:
            return t, hw
    return max_tile, _round_up(hw, max_tile)     # pad trailing tile


# -----------------------------------------------------------------------------
# Fused Pallas kernel: heatmap target + locref target + locref weights
# -----------------------------------------------------------------------------
def _fused_target_kernel(coords_ref, hp_ref, lp_ref,
                         heat_ref, locref_ref, lw_ref, *,
                         num_animals, num_kpts, sigma, radius, locref_scale):
    """One (batch element, HW tile) per grid step.

    coords_ref: (1, 2, T)       pixel-center coords; row 0 = x, row 1 = y.
    hp_ref:     (1, 3*A, K, 1)  per-animal [x, y, vis] columns (heatmap path).
    lp_ref:     (1, 4*A, 2K, 1) per-animal [x, y, vis, is_dx] columns, rows in
                                interleaved dx/dy channel order (locref path).
    heat_ref:   (1, K, T)   f32 Gaussian heatmap target.
    locref_ref: (1, 2K, T)  f32 locref target (dx_k, dy_k interleaved).
    lw_ref:     (1, 2K, T)  bf16 locref weights (in-radius & visible mask).
    """
    K = num_kpts
    C = 2 * num_kpts
    T = heat_ref.shape[2]

    xy = coords_ref[0]                       # (2, T)
    px1 = xy[0:1]                            # (1, T)
    py1 = xy[1:2]                            # (1, T)
    # Hoisted broadcasts (JAX does not CSE broadcast_in_dim inside loops).
    pxK = jnp.broadcast_to(px1, (K, T))
    pyK = jnp.broadcast_to(py1, (K, T))
    pxC = jnp.broadcast_to(px1, (C, T))
    pyC = jnp.broadcast_to(py1, (C, T))

    BIG = jnp.float32(1e30)                  # "invisible" sentinel; exp -> 0

    # ---- heatmap: max over animals of Gaussian == exp(-min d2 / 2 sigma^2) ----
    # TODO(synk): for large num_animals switch these static loops to
    # lax.fori_loop with (min_d2, val, mask) as the carry to bound vreg live
    # ranges; A <= 4 is the common DLC case and unrolls fine.
    min_d2 = jnp.full((K, T), BIG, jnp.float32)
    for a in range(num_animals):             # static, tiny
        kx = hp_ref[0, 3 * a + 0]            # (K, 1)
        ky = hp_ref[0, 3 * a + 1]
        vis = hp_ref[0, 3 * a + 2]
        d2 = (pxK - kx) ** 2 + (pyK - ky) ** 2
        d2 = jnp.where(vis > 0.0, d2, BIG)
        min_d2 = jnp.minimum(min_d2, d2)
    heat_ref[0] = jnp.exp(min_d2 * (-1.0 / (2.0 * sigma * sigma)))

    # ---- locref: interleaved dx/dy channels; later animal overwrites ----
    # (d2 is recomputed at (2K, T) rather than expanded from (K, T): the
    #  sublane-interleave that a (K,T)->(2K,T) expansion needs is riskier to
    #  lower than the extra VALU work, and the kernel is HBM-write-bound.)
    r2 = jnp.float32(radius * radius)
    val = jnp.zeros((C, T), jnp.float32)
    mask = jnp.zeros((C, T), jnp.float32)
    for a in range(num_animals):             # static, tiny
        kx = lp_ref[0, 4 * a + 0]            # (2K, 1)
        ky = lp_ref[0, 4 * a + 1]
        vis = lp_ref[0, 4 * a + 2]
        isx = lp_ref[0, 4 * a + 3]           # 1.0 on dx rows, 0.0 on dy rows
        d2 = (pxC - kx) ** 2 + (pyC - ky) ** 2
        within = (d2 <= r2) & (vis > 0.0)
        dxy = jnp.where(isx > 0.0, kx - pxC, ky - pyC) * locref_scale
        val = jnp.where(within, dxy, val)
        mask = jnp.where(within, 1.0, mask)
    locref_ref[0] = val
    lw_ref[0] = mask.astype(lw_ref.dtype)


# -----------------------------------------------------------------------------
# Fused sub-generator (heatmap + locref) wrapping one pallas_call
# -----------------------------------------------------------------------------
def make_fused_heatmap_locref_generator(num_animals: int, sigma: float,
                                        radius: float, locref_stdev: float,
                                        label_keypoint_key: str = "keypoints",
                                        locref_weights_dtype=jnp.bfloat16):
    A = int(num_animals)
    lw_itemsize = int(np.dtype(locref_weights_dtype).itemsize)
    _ones_cache = {}   # per-shape cached all-ones heatmap weights (no per-call write)

    def generator(stride, outputs, labels):
        pred = outputs["heatmap"]                  # (B, K, H, W) -- shape only
        B, K, H, W = pred.shape
        HW = H * W
        C = 2 * K
        stride_f = float(stride)

        HW_TILE, HW_PAD = _choose_hw_tiling(HW)
        n_hw = HW_PAD // HW_TILE

        kpts = labels[label_keypoint_key].astype(jnp.float32)   # (B, A, K, 3)
        x = kpts[..., 0]                                        # (B, A, K)
        y = kpts[..., 1]
        v = kpts[..., 2]

        # Tiny per-keypoint parameter tensors, column-oriented so the kernel
        # reads them directly as (K,1) / (2K,1) sublane vectors.
        hp = jnp.stack([x, y, v], axis=2).reshape(B, 3 * A, K, 1)
        x2 = jnp.repeat(x, 2, axis=2)                           # (B, A, 2K)
        y2 = jnp.repeat(y, 2, axis=2)
        v2 = jnp.repeat(v, 2, axis=2)
        isx = jnp.broadcast_to(
            jnp.tile(jnp.array([1.0, 0.0], jnp.float32), K), (B, A, C))
        lp = jnp.stack([x2, y2, v2, isx], axis=2).reshape(B, 4 * A, C, 1)

        # Flat (row-major) pixel-center coordinates, lane-dense, padded to the
        # tiled HW extent.
        xs = jnp.arange(W, dtype=jnp.float32) * stride_f + 0.5 * stride_f
        ys = jnp.arange(H, dtype=jnp.float32) * stride_f + 0.5 * stride_f
        px = jnp.tile(xs, H)                                    # (HW,)
        py = jnp.repeat(ys, W)                                  # (HW,)
        coords = jnp.stack([px, py])                            # (2, HW)
        if HW_PAD != HW:
            coords = jnp.pad(coords, ((0, 0), (0, HW_PAD - HW)))
        coords = coords.reshape(1, 2, HW_PAD)

        kernel = functools.partial(
            _fused_target_kernel, num_animals=A, num_kpts=K,
            sigma=float(sigma), radius=float(radius),
            locref_scale=1.0 / float(locref_stdev))

        # VMEM budget: padded per-step block bytes, double-buffered, + headroom.
        # Capped at 48 MiB (safe under v7x's 64 MiB physical VMEM; v5e/v6e have
        # more). With HW tiling the needed budget is far below this anyway.
        Kp = _round_up(K, 8)
        Cp = _round_up(C, 8)
        out_bytes = (Kp + Cp) * HW_TILE * 4 + Cp * HW_TILE * lw_itemsize
        in_bytes = (8 * HW_TILE * 4                      # coords (sublane-padded)
                    + 3 * A * Kp * 128 * 4               # hp (lane-padded)
                    + 4 * A * Cp * 128 * 4)              # lp (lane-padded)
        vmem_limit = int(min(max(2 * (out_bytes + in_bytes) + (8 << 20),
                                 32 << 20), 48 << 20))

        heat, locref, lweights = pl.pallas_call(
            kernel,
            out_shape=(jax.ShapeDtypeStruct((B, K, HW_PAD), jnp.float32),
                       jax.ShapeDtypeStruct((B, C, HW_PAD), jnp.float32),
                       jax.ShapeDtypeStruct((B, C, HW_PAD), locref_weights_dtype)),
            grid_spec=pltpu.PrefetchScalarGridSpec(
                num_scalar_prefetch=0,
                grid=(B, n_hw),
                in_specs=[
                    pl.BlockSpec((1, 2, HW_TILE), lambda b, t: (0, 0, t)),
                    pl.BlockSpec((1, 3 * A, K, 1), lambda b, t: (b, 0, 0, 0)),
                    pl.BlockSpec((1, 4 * A, C, 1), lambda b, t: (b, 0, 0, 0)),
                ],
                out_specs=[
                    pl.BlockSpec((1, K, HW_TILE), lambda b, t: (b, 0, t)),
                    pl.BlockSpec((1, C, HW_TILE), lambda b, t: (b, 0, t)),
                    pl.BlockSpec((1, C, HW_TILE), lambda b, t: (b, 0, t)),
                ]),
            compiler_params=pltpu.CompilerParams(
                dimension_semantics=("parallel", "parallel"),
                vmem_limit_bytes=vmem_limit),
        )(coords, hp, lp)

        # Strip HW padding (no-op when HW % 128 == 0 fits a single tile layout)
        # and reshape back to NCHW (free when unpadded).
        if HW_PAD != HW:
            heat = heat[:, :, :HW]
            locref = locref[:, :, :HW]
            lweights = lweights[:, :, :HW]
        heat = heat.reshape(B, K, H, W)
        locref = locref.reshape(B, C, H, W)
        lweights = lweights.reshape(B, C, H, W)

        # Constant all-ones heatmap weights: cached per shape, not re-written
        # to HBM on every call.
        key_shape = (B, K, H, W)
        if key_shape not in _ones_cache:
            _ones_cache[key_shape] = jnp.ones(key_shape, jnp.float32)
        heat_weights = _ones_cache[key_shape]

        return {
            "heatmap": {"target": heat, "weights": heat_weights},
            "locref": {"target": locref, "weights": lweights},
        }

    return generator


# -----------------------------------------------------------------------------
# SequentialGenerator: merges the dicts of its sub-generators (exact semantics
# of the PyTorch module's forward).
# -----------------------------------------------------------------------------
class SequentialGenerator:
    def __init__(self, generators, label_keypoint_key: str = "keypoints"):
        self.label_keypoint_key = label_keypoint_key
        self._generators = list(generators)

    @property
    def generators(self):
        return self._generators

    def __call__(self, stride, outputs, labels):
        dict_ = {}
        for gen in self._generators:
            dict_.update(gen(stride, outputs, labels))
        return dict_


# -----------------------------------------------------------------------------
# Pure-JAX reference (single-animal, sufficient for the correctness check)
# -----------------------------------------------------------------------------
def _reference_targets_a1(stride, outputs, labels, *, sigma, radius, locref_stdev):
    pred = outputs["heatmap"]
    B, K, H, W = pred.shape
    kpts = labels["keypoints"][:, 0].astype(jnp.float32)         # (B, K, 3)
    xs = jnp.arange(W, dtype=jnp.float32) * stride + 0.5 * stride
    ys = jnp.arange(H, dtype=jnp.float32) * stride + 0.5 * stride
    kx = kpts[..., 0][:, :, None, None]
    ky = kpts[..., 1][:, :, None, None]
    vis = kpts[..., 2][:, :, None, None]
    d2 = (xs[None, None, None, :] - kx) ** 2 + (ys[None, None, :, None] - ky) ** 2
    heat = jnp.where(vis > 0, jnp.exp(-d2 / (2.0 * sigma * sigma)), 0.0)
    within = (d2 <= radius * radius) & (vis > 0)
    scale = 1.0 / locref_stdev
    dx = jnp.where(within, (kx - xs[None, None, None, :]) * scale, 0.0)
    dy = jnp.where(within, (ky - ys[None, None, :, None]) * scale, 0.0)
    locref = jnp.stack([dx, dy], axis=2).reshape(B, 2 * K, H, W)
    lweights = jnp.repeat(within.astype(jnp.float32), 2, axis=1)
    return heat, locref, lweights


def _run_and_check(B, A, K, H, W, stride, sigma, radius, locref_stdev, seed):
    key = jax.random.PRNGKey(seed)
    kx_key, ky_key = jax.random.split(key)
    kpt_x = jax.random.uniform(kx_key, (B, A, K, 1), minval=0.0, maxval=W * stride)
    kpt_y = jax.random.uniform(ky_key, (B, A, K, 1), minval=0.0, maxval=H * stride)
    vis = jnp.ones((B, A, K, 1), jnp.float32)
    keypoints = jnp.concatenate([kpt_x, kpt_y, vis], axis=-1)    # (B, A, K, 3)

    # Model head output -- used only for its spatial shape (as in DLC).
    outputs = {"heatmap": jnp.zeros((B, K, H, W), jnp.float32)}
    labels = {"keypoints": keypoints}

    gen = SequentialGenerator(
        generators=[
            make_fused_heatmap_locref_generator(
                num_animals=A, sigma=sigma, radius=radius,
                locref_stdev=locref_stdev, label_keypoint_key="keypoints"),
        ],
        label_keypoint_key="keypoints",
    )

    targets = gen(stride, outputs, labels)
    jax.block_until_ready(jax.tree_util.tree_leaves(targets))

    assert targets["heatmap"]["target"].shape == (B, K, H, W)
    assert targets["heatmap"]["weights"].shape == (B, K, H, W)
    assert targets["locref"]["target"].shape == (B, 2 * K, H, W)
    assert targets["locref"]["weights"].shape == (B, 2 * K, H, W)

    ref_heat, ref_locref, ref_lw = _reference_targets_a1(
        float(stride), outputs, labels,
        sigma=sigma, radius=radius, locref_stdev=locref_stdev)
    assert jnp.allclose(targets["heatmap"]["target"], ref_heat, atol=1e-3, rtol=1e-3)
    assert jnp.allclose(targets["locref"]["target"], ref_locref, atol=1e-3, rtol=1e-3)
    assert jnp.allclose(targets["locref"]["weights"].astype(jnp.float32), ref_lw,
                        atol=1e-3, rtol=1e-3)
    assert jnp.all(targets["heatmap"]["weights"] == 1.0)


# -----------------------------------------------------------------------------
# Demo
# -----------------------------------------------------------------------------
if __name__ == "__main__":
    SIGMA = 5.0
    RADIUS = 10.0
    LOCREF_STDEV = 7.2801

    # Main demo config (HW is a multiple of 128 -> single unpadded tile).
    _run_and_check(B=2, A=1, K=4, H=16, W=16, stride=8,
                   sigma=SIGMA, radius=RADIUS, locref_stdev=LOCREF_STDEV, seed=0)

    # Exercise the HW-padding path (HW = 144 -> padded to 256 lanes, sliced back).
    _run_and_check(B=1, A=1, K=3, H=12, W=12, stride=8,
                   sigma=SIGMA, radius=RADIUS, locref_stdev=LOCREF_STDEV, seed=1)

    # TODO(synk): registry-based building of arbitrary sub-generators from config
    # dicts is framework glue with no Pallas equivalent; concrete generators are
    # constructed explicitly above instead.
    print("KERNEL_OK")
</pallas_src>

<mosaic_0001>
module attributes {stable_mosaic.version = 11 : i64} {
  func.func @_fused_target_kernel(%arg0: i32, %arg1: i32, %arg2: memref<1x2x256xf32, #tpu.memory_space<vmem>>, %arg3: memref<1x3x4x1xf32, #tpu.memory_space<vmem>>, %arg4: memref<1x4x8x1xf32, #tpu.memory_space<vmem>>, %arg5: memref<1x4x256xf32, #tpu.memory_space<vmem>>, %arg6: memref<1x8x256xf32, #tpu.memory_space<vmem>>, %arg7: memref<1x8x256xbf16, #tpu.memory_space<vmem>>) attributes {dimension_semantics = [#tpu.dimension_semantics<parallel>, #tpu.dimension_semantics<parallel>], iteration_bounds = array<i64: 2, 1>, scalar_prefetch = 0 : i64, scratch_operands = 0 : i64, tpu.core_type = #tpu.core_type<tc>, window_params = [{transform_indices = @transform_0, window_bounds = array<i64: 1, 2, 256>}, {transform_indices = @transform_1, window_bounds = array<i64: 1, 3, 4, 1>}, {transform_indices = @transform_2, window_bounds = array<i64: 1, 4, 8, 1>}, {transform_indices = @transform_3, window_bounds = array<i64: 1, 4, 256>}, {transform_indices = @transform_4, window_bounds = array<i64: 1, 8, 256>}, {transform_indices = @transform_5, window_bounds = array<i64: 1, 8, 256>}]} {
    %c0 = arith.constant 0 : index
    %c0_0 = arith.constant 0 : index
    %c0_1 = arith.constant 0 : index
    %0 = vector.load %arg2[%c0, %c0_0, %c0_1] : memref<1x2x256xf32, #tpu.memory_space<vmem>>, vector<1x2x256xf32>
    %1 = vector.shape_cast %0 : vector<1x2x256xf32> to vector<2x256xf32>
    %2 = vector.extract_strided_slice %1 {offsets = [0, 0], sizes = [1, 256], strides = [1, 1]} : vector<2x256xf32> to vector<1x256xf32>
    %3 = vector.extract_strided_slice %1 {offsets = [1, 0], sizes = [1, 256], strides = [1, 1]} : vector<2x256xf32> to vector<1x256xf32>
    %4 = vector.shape_cast %2 : vector<1x256xf32> to vector<1x256xf32>
    %5 = vector.broadcast %4 : vector<1x256xf32> to vector<4x256xf32>
    %6 = vector.shape_cast %3 : vector<1x256xf32> to vector<1x256xf32>
    %7 = vector.broadcast %6 : vector<1x256xf32> to vector<4x256xf32>
    %8 = vector.shape_cast %2 : vector<1x256xf32> to vector<1x256xf32>
    %9 = vector.broadcast %8 : vector<1x256xf32> to vector<8x256xf32>
    %10 = vector.shape_cast %3 : vector<1x256xf32> to vector<1x256xf32>
    %11 = vector.broadcast %10 : vector<1x256xf32> to vector<8x256xf32>
    %cst = arith.constant 1.000000e+30 : f32
    %12 = vector.broadcast %cst : f32 to vector<4x256xf32>
    %c0_2 = arith.constant 0 : index
    %c0_3 = arith.constant 0 : index
    %c0_4 = arith.constant 0 : index
    %c0_5 = arith.constant 0 : index
    %13 = vector.load %arg3[%c0_2, %c0_3, %c0_4, %c0_5] : memref<1x3x4x1xf32, #tpu.memory_space<vmem>>, vector<1x1x4x1xf32>
    %14 = vector.shape_cast %13 : vector<1x1x4x1xf32> to vector<4x1xf32>
    %c0_6 = arith.constant 0 : index
    %c1 = arith.constant 1 : index
    %c0_7 = arith.constant 0 : index
    %c0_8 = arith.constant 0 : index
    %15 = vector.load %arg3[%c0_6, %c1, %c0_7, %c0_8] : memref<1x3x4x1xf32, #tpu.memory_space<vmem>>, vector<1x1x4x1xf32>
    %16 = vector.shape_cast %15 : vector<1x1x4x1xf32> to vector<4x1xf32>
    %c0_9 = arith.constant 0 : index
    %c2 = arith.constant 2 : index
    %c0_10 = arith.constant 0 : index
    %c0_11 = arith.constant 0 : index
    %17 = vector.load %arg3[%c0_9, %c2, %c0_10, %c0_11] : memref<1x3x4x1xf32, #tpu.memory_space<vmem>>, vector<1x1x4x1xf32>
    %18 = vector.shape_cast %17 : vector<1x1x4x1xf32> to vector<4x1xf32>
    %19 = vector.broadcast %14 : vector<4x1xf32> to vector<4x256xf32>
    %20 = arith.subf %5, %19 : vector<4x256xf32>
    %21 = arith.mulf %20, %20 : vector<4x256xf32>
    %22 = vector.broadcast %16 : vector<4x1xf32> to vector<4x256xf32>
    %23 = arith.subf %7, %22 : vector<4x256xf32>
    %24 = arith.mulf %23, %23 : vector<4x256xf32>
    %25 = arith.addf %21, %24 : vector<4x256xf32>
    %cst_12 = arith.constant 0.000000e+00 : f32
    %26 = vector.broadcast %cst_12 : f32 to vector<4x1xf32>
    %27 = arith.cmpf ogt, %18, %26 : vector<4x1xf32>
    %cst_13 = arith.constant 1.000000e+30 : f32
    %28 = vector.shape_cast %27 : vector<4x1xi1> to vector<4x1xi1>
    %29 = vector.broadcast %28 : vector<4x1xi1> to vector<4x256xi1>
    %30 = vector.broadcast %cst_13 : f32 to vector<4x256xf32>
    %31 = arith.select %29, %25, %30 : vector<4x256xi1>, vector<4x256xf32>
    %32 = arith.minimumf %12, %31 : vector<4x256xf32>
    %cst_14 = arith.constant -2.000000e-02 : f32
    %33 = vector.broadcast %cst_14 : f32 to vector<4x256xf32>
    %34 = arith.mulf %32, %33 : vector<4x256xf32>
    %35 = math.exp %34 : vector<4x256xf32>
    %c0_15 = arith.constant 0 : index
    %c0_16 = arith.constant 0 : index
    %c0_17 = arith.constant 0 : index
    %36 = vector.load %arg5[%c0_15, %c0_16, %c0_17] : memref<1x4x256xf32, #tpu.memory_space<vmem>>, vector<1x4x256xf32>
    %37 = vector.shape_cast %36 : vector<1x4x256xf32> to vector<4x256xf32>
    %38 = vector.shape_cast %35 : vector<4x256xf32> to vector<1x4x256xf32>
    tpu.vector_store %arg5[%c0_15, %c0_16, %c0_17], %38 {strides = array<i32>} : memref<1x4x256xf32, #tpu.memory_space<vmem>>, vector<1x4x256xf32>,
    %cst_18 = arith.constant 0.000000e+00 : f32
    %39 = vector.broadcast %cst_18 : f32 to vector<8x256xf32>
    %cst_19 = arith.constant 0.000000e+00 : f32
    %40 = vector.broadcast %cst_19 : f32 to vector<8x256xf32>
    %c0_20 = arith.constant 0 : index
    %c0_21 = arith.constant 0 : index
    %c0_22 = arith.constant 0 : index
    %c0_23 = arith.constant 0 : index
    %41 = vector.load %arg4[%c0_20, %c0_21, %c0_22, %c0_23] : memref<1x4x8x1xf32, #tpu.memory_space<vmem>>, vector<1x1x8x1xf32>
    %42 = vector.shape_cast %41 : vector<1x1x8x1xf32> to vector<8x1xf32>
    %c0_24 = arith.constant 0 : index
    %c1_25 = arith.constant 1 : index
    %c0_26 = arith.constant 0 : index
    %c0_27 = arith.constant 0 : index
    %43 = vector.load %arg4[%c0_24, %c1_25, %c0_26, %c0_27] : memref<1x4x8x1xf32, #tpu.memory_space<vmem>>, vector<1x1x8x1xf32>
    %44 = vector.shape_cast %43 : vector<1x1x8x1xf32> to vector<8x1xf32>
    %c0_28 = arith.constant 0 : index
    %c2_29 = arith.constant 2 : index
    %c0_30 = arith.constant 0 : index
    %c0_31 = arith.constant 0 : index
    %45 = vector.load %arg4[%c0_28, %c2_29, %c0_30, %c0_31] : memref<1x4x8x1xf32, #tpu.memory_space<vmem>>, vector<1x1x8x1xf32>
    %46 = vector.shape_cast %45 : vector<1x1x8x1xf32> to vector<8x1xf32>
    %c0_32 = arith.constant 0 : index
    %c3 = arith.constant 3 : index
    %c0_33 = arith.constant 0 : index
    %c0_34 = arith.constant 0 : index
    %47 = vector.load %arg4[%c0_32, %c3, %c0_33, %c0_34] : memref<1x4x8x1xf32, #tpu.memory_space<vmem>>, vector<1x1x8x1xf32>
    %48 = vector.shape_cast %47 : vector<1x1x8x1xf32> to vector<8x1xf32>
    %49 = vector.broadcast %42 : vector<8x1xf32> to vector<8x256xf32>
    %50 = arith.subf %9, %49 : vector<8x256xf32>
    %51 = arith.mulf %50, %50 : vector<8x256xf32>
    %52 = vector.broadcast %44 : vector<8x1xf32> to vector<8x256xf32>
    %53 = arith.subf %11, %52 : vector<8x256xf32>
    %54 = arith.mulf %53, %53 : vector<8x256xf32>
    %55 = arith.addf %51, %54 : vector<8x256xf32>
    %cst_35 = arith.constant 1.000000e+02 : f32
    %56 = vector.broadcast %cst_35 : f32 to vector<8x256xf32>
    %57 = arith.cmpf ole, %55, %56 : vector<8x256xf32>
    %cst_36 = arith.constant 0.000000e+00 : f32
    %58 = vector.broadcast %cst_36 : f32 to vector<8x1xf32>
    %59 = arith.cmpf ogt, %46, %58 : vector<8x1xf32>
    %60 = vector.broadcast %59 : vector<8x1xi1> to vector<8x256xi1>
    %61 = arith.andi %57, %60 : vector<8x256xi1>
    %cst_37 = arith.constant 0.000000e+00 : f32
    %62 = vector.broadcast %cst_37 : f32 to vector<8x1xf32>
    %63 = arith.cmpf ogt, %48, %62 : vector<8x1xf32>
    %64 = vector.broadcast %42 : vector<8x1xf32> to vector<8x256xf32>
    %65 = arith.subf %64, %9 : vector<8x256xf32>
    %66 = vector.broadcast %44 : vector<8x1xf32> to vector<8x256xf32>
    %67 = arith.subf %66, %11 : vector<8x256xf32>
    %68 = vector.shape_cast %63 : vector<8x1xi1> to vector<8x1xi1>
    %69 = vector.broadcast %68 : vector<8x1xi1> to vector<8x256xi1>
    %70 = arith.select %69, %65, %67 : vector<8x256xi1>, vector<8x256xf32>
    %cst_38 = arith.constant 0.137360752 : f32
    %71 = vector.broadcast %cst_38 : f32 to vector<8x256xf32>
    %72 = arith.mulf %70, %71 : vector<8x256xf32>
    %73 = arith.select %61, %72, %39 : vector<8x256xi1>, vector<8x256xf32>
    %cst_39 = arith.constant 1.000000e+00 : f32
    %74 = vector.broadcast %cst_39 : f32 to vector<8x256xf32>
    %75 = arith.select %61, %74, %40 : vector<8x256xi1>, vector<8x256xf32>
    %c0_40 = arith.constant 0 : index
    %c0_41 = arith.constant 0 : index
    %c0_42 = arith.constant 0 : index
    %76 = vector.load %arg6[%c0_40, %c0_41, %c0_42] : memref<1x8x256xf32, #tpu.memory_space<vmem>>, vector<1x8x256xf32>
    %77 = vector.shape_cast %76 : vector<1x8x256xf32> to vector<8x256xf32>
    %78 = vector.shape_cast %73 : vector<8x256xf32> to vector<1x8x256xf32>
    tpu.vector_store %arg6[%c0_40, %c0_41, %c0_42], %78 {strides = array<i32>} : memref<1x8x256xf32, #tpu.memory_space<vmem>>, vector<1x8x256xf32>,
    %79 = arith.truncf %75 : vector<8x256xf32> to vector<8x256xbf16>
    %c0_43 = arith.constant 0 : index
    %c0_44 = arith.constant 0 : index
    %c0_45 = arith.constant 0 : index
    %80 = vector.load %arg7[%c0_43, %c0_44, %c0_45] : memref<1x8x256xbf16, #tpu.memory_space<vmem>>, vector<1x8x256xbf16>
    %81 = vector.shape_cast %80 : vector<1x8x256xbf16> to vector<8x256xbf16>
    %82 = vector.shape_cast %79 : vector<8x256xbf16> to vector<1x8x256xbf16>
    tpu.vector_store %arg7[%c0_43, %c0_44, %c0_45], %82 {strides = array<i32>} : memref<1x8x256xbf16, #tpu.memory_space<vmem>>, vector<1x8x256xbf16>,
    return
  }
  func.func @transform_0(%arg0: i32, %arg1: i32) -> (i32, i32, i32) {
    %c0_i32 = arith.constant 0 : i32
    %c0_i32_0 = arith.constant 0 : i32
    %c0_i32_1 = arith.constant 0 : i32
    return %c0_i32, %c0_i32_0, %arg1 : i32, i32, i32
  }
  func.func @transform_1(%arg0: i32, %arg1: i32) -> (i32, i32, i32, i32) {
    %c0_i32 = arith.constant 0 : i32
    %c0_i32_0 = arith.constant 0 : i32
    %c0_i32_1 = arith.constant 0 : i32
    %c0_i32_2 = arith.constant 0 : i32
    return %arg0, %c0_i32, %c0_i32_0, %c0_i32_1 : i32, i32, i32, i32
  }
  func.func @transform_2(%arg0: i32, %arg1: i32) -> (i32, i32, i32, i32) {
    %c0_i32 = arith.constant 0 : i32
    %c0_i32_0 = arith.constant 0 : i32
    %c0_i32_1 = arith.constant 0 : i32
    %c0_i32_2 = arith.constant 0 : i32
    return %arg0, %c0_i32, %c0_i32_0, %c0_i32_1 : i32, i32, i32, i32
  }
  func.func @transform_3(%arg0: i32, %arg1: i32) -> (i32, i32, i32) {
    %c0_i32 = arith.constant 0 : i32
    %c0_i32_0 = arith.constant 0 : i32
    return %arg0, %c0_i32, %arg1 : i32, i32, i32
  }
  func.func @transform_4(%arg0: i32, %arg1: i32) -> (i32, i32, i32) {
    %c0_i32 = arith.constant 0 : i32
    %c0_i32_0 = arith.constant 0 : i32
    return %arg0, %c0_i32, %arg1 : i32, i32, i32
  }
  func.func @transform_5(%arg0: i32, %arg1: i32) -> (i32, i32, i32) {
    %c0_i32 = arith.constant 0 : i32
    %c0_i32_0 = arith.constant 0 : i32
    return %arg0, %c0_i32, %arg1 : i32, i32, i32
  }
}

</mosaic_0001>

<llo_original>
// kernel: tpu_custom_call.1
$region0: #{tpu_custom_call.1}
  #allocation0 [shape = 'u32[]', space=smem, size = 0x4, offset = 0x4, fixed_abs, tag = 'smem constant byte address 0x4 - core index']
  #allocation1 [shape = 'u32[144,128]{1,0:T(1,128)}', space=vmem, size = 0x12000, scoped, tag = 'internal scratch']
  %s0 = inlined_call_operand.vmem [shape: f32[1,2,256], index: 0, kind: input, shape index: {}]
  %s1 = inlined_call_operand.vmem [shape: f32[2,3,4,1], index: 1, kind: input, shape index: {}]
  %s2 = inlined_call_operand.vmem [shape: f32[2,4,8,1], index: 2, kind: input, shape index: {}]
  %s3 = inlined_call_operand.hbm [shape: f32[2,4,256], index: 3, kind: output, shape index: {0}]
  %s4 = inlined_call_operand.hbm [shape: f32[2,8,256], index: 4, kind: output, shape index: {1}]
  %s5 = inlined_call_operand.hbm [shape: bf16[2,8,256], index: 5, kind: output, shape index: {2}]
  %6 = xla_tuple %s3, %s4, %s5
  %s7 = sld [smem:[#allocation0]]
  $region61: #{tpu_custom_call.1} parent=0
    _
  %s9 = ssub.s32 1, %s7
  %s10 = scalar_select 0, %s9, %s7
  $region1: #{tpu_custom_call.1} parent=0
    #allocation2 [shape = 'u8[8192]{0}', space=vmem, size = 0x2000, scoped, tag = 'output window, operand 0']
    #allocation3 [shape = 's32[2]{0}', space=sflag, size = 0x8, scoped, tag = 'scoped memory for tpu_custom_call.1']
    #allocation4 [shape = 'u8[16384]{0}', space=vmem, size = 0x4000, scoped, tag = 'output window, operand 1']
    #allocation5 [shape = 's32[2]{0}', space=sflag, size = 0x8, scoped, tag = 'scoped memory for tpu_custom_call.1']
    #allocation6 [shape = 'u8[8192]{0}', space=vmem, size = 0x2000, scoped, tag = 'output window, operand 2']
    %11 = vsyncpa [#allocation3], 0
    %s12 = scalar_lea.sflag [#allocation3], 1
    %13 = vsyncpa %s12, 0
    %14 = vsyncpa [#allocation5], 0
    %s15 = scalar_lea.sflag [#allocation5], 1
    %16 = vsyncpa %s15, 0
    loop: start=0, step=1, limit=4
    $region2: #{tpu_custom_call.1} parent=1 // loop_pre_header
      _
    $region3: #{tpu_custom_call.1} parent=1 // loop_header
      %s18 = sphi 0, %s22
      %p19 = scmp.ge.s32.totalorder %s18, 4
      %s25 = sphi 0, %s37
      %s26 = sphi 0, %s33
      %s27 = sphi 0, %s25
      %s28 = sphi 0, %s26
      %s29 = sphi 0, %s27
      %s30 = sphi 0, %s28
      %s40 = sphi 0, %s42
      %s43 = sphi 0, %s40
      %s44 = sphi 0, %s43
      %s60 = sphi 0, %s44
      %s66 = sphi 0, %s68
      %s69 = sphi 0, %s66
      %s70 = sphi 0, %s69
      %s86 = sphi 0, %s70
      %s92 = sphi 0, %s94
      %s95 = sphi 0, %s92
      %s96 = sphi 0, %s95
      %s112 = sphi 0, %s96
      %s120 = sphi 0, %s122
      %s123 = sphi 0, %s120
      %s124 = sphi 0, %s123
      %s140 = sphi 0, %s124
      %s148 = sphi 0, %s150
      %s151 = sphi 0, %s148
      %s152 = sphi 0, %s151
      %s168 = sphi 0, %s152
      %s176 = sphi 0, %s178
      %s179 = sphi 0, %s176
      %s180 = sphi 0, %s179
      %s196 = sphi 0, %s180
    $region4: #{tpu_custom_call.1} parent=1 // loop_header_branch
      %21 = sbr.rel (%p19) target = $region8
    $region5: #{tpu_custom_call.1} parent=1 // loop_body
      %s23 = ssub.s32 %s18, 1
      %s24 = ssub.s32 %s18, 2
      %s31 = sadd.s32 1, %s26
      %p32 = scmp.ge.s32.totalorder %s31, 1
      %s33 = scalar_select %p32, 0, %s31
      %s34 = sadd.s32 1, %s25
      %s35 = scalar_select %p32, %s34, %s25
      %p36 = scmp.ge.s32.totalorder %s35, 2
      %s37 = scalar_select %p36, 0, %s35
      %s38 = ssub.s32 %s26, %s33
      %p39 = scmp.eq.s32.totalorder %s38, 0
      %s41 = sadd.s32 %s40, 1
      %s42 = scalar_select %p39, %s40, %s41
      %p45 = pneg %p39
      %p46 = scmp.eq.s32.totalorder %s18, 1
      %p47 = por %p45, %p46
      %p48 = scmp.ne.s32.totalorder %s40, %s43
      %p49 = scmp.eq.s32.totalorder %s18, 0
      %p50 = por %p48, %p49
      %p51 = scmp.ne.s32.totalorder %s40, %s43
      %p52 = scmp.eq.s32.totalorder %s23, 1
      %p53 = por %p51, %p52
      %p54 = scmp.ne.s32.totalorder %s43, %s44
      %p55 = scmp.eq.s32.totalorder %s23, 0
      %p56 = por %p54, %p55
      %p57 = scmp.ne.s32.totalorder %s43, %s44
      %p58 = scmp.eq.s32.totalorder %s24, 1
      %p59 = por %p57, %p58
      %p61 = scmp.ne.s32.totalorder %s44, %s60
      %p62 = scmp.eq.s32.totalorder %s24, 0
      %p63 = por %p61, %p62
      %s64 = ssub.s32 %s25, %s37
      %p65 = scmp.eq.s32.totalorder %s64, 0
      %s67 = sadd.s32 %s66, 1
      %s68 = scalar_select %p65, %s66, %s67
      %p71 = pneg %p65
      %p72 = scmp.eq.s32.totalorder %s18, 1
      %p73 = por %p71, %p72
      %p74 = scmp.ne.s32.totalorder %s66, %s69
      %p75 = scmp.eq.s32.totalorder %s18, 0
      %p76 = por %p74, %p75
      %p77 = scmp.ne.s32.totalorder %s66, %s69
      %p78 = scmp.eq.s32.totalorder %s23, 1
      %p79 = por %p77, %p78
      %p80 = scmp.ne.s32.totalorder %s69, %s70
      %p81 = scmp.eq.s32.totalorder %s23, 0
      %p82 = por %p80, %p81
      %p83 = scmp.ne.s32.totalorder %s69, %s70
      %p84 = scmp.eq.s32.totalorder %s24, 1
      %p85 = por %p83, %p84
      %p87 = scmp.ne.s32.totalorder %s70, %s86
      %p88 = scmp.eq.s32.totalorder %s24, 0
      %p89 = por %p87, %p88
      %s90 = ssub.s32 %s25, %s37
      %p91 = scmp.eq.s32.totalorder %s90, 0
      %s93 = sadd.s32 %s92, 1
      %s94 = scalar_select %p91, %s92, %s93
      %p97 = pneg %p91
      %p98 = scmp.eq.s32.totalorder %s18, 1
      %p99 = por %p97, %p98
      %p100 = scmp.ne.s32.totalorder %s92, %s95
      %p101 = scmp.eq.s32.totalorder %s18, 0
      %p102 = por %p100, %p101
      %p103 = scmp.ne.s32.totalorder %s92, %s95
      %p104 = scmp.eq.s32.totalorder %s23, 1
      %p105 = por %p103, %p104
      %p106 = scmp.ne.s32.totalorder %s95, %s96
      %p107 = scmp.eq.s32.totalorder %s23, 0
      %p108 = por %p106, %p107
      %p109 = scmp.ne.s32.totalorder %s95, %s96
      %p110 = scmp.eq.s32.totalorder %s24, 1
      %p111 = por %p109, %p110
      %p113 = scmp.ne.s32.totalorder %s96, %s112
      %p114 = scmp.eq.s32.totalorder %s24, 0
      %p115 = por %p113, %p114
      %s116 = ssub.s32 %s25, %s37
      %s117 = ssub.s32 %s26, %s33
      %s118 = sor.u32 %s116, %s117
      %p119 = scmp.eq.s32.totalorder %s118, 0
      %s121 = sadd.s32 %s120, 1
      %s122 = scalar_select %p119, %s120, %s121
      %p125 = pneg %p119
      %p126 = scmp.eq.s32.totalorder %s18, 1
      %p127 = por %p125, %p126
      %p128 = scmp.ne.s32.totalorder %s120, %s123
      %p129 = scmp.eq.s32.totalorder %s18, 0
      %p130 = por %p128, %p129
      %p131 = scmp.ne.s32.totalorder %s120, %s123
      %p132 = scmp.eq.s32.totalorder %s23, 1
      %p133 = por %p131, %p132
      %p134 = scmp.ne.s32.totalorder %s123, %s124
      %p135 = scmp.eq.s32.totalorder %s23, 0
      %p136 = por %p134, %p135
      %p137 = scmp.ne.s32.totalorder %s123, %s124
      %p138 = scmp.eq.s32.totalorder %s24, 1
      %p139 = por %p137, %p138
      %p141 = scmp.ne.s32.totalorder %s124, %s140
      %p142 = scmp.eq.s32.totalorder %s24, 0
      %p143 = por %p141, %p142
      %s144 = ssub.s32 %s25, %s37
      %s145 = ssub.s32 %s26, %s33
      %s146 = sor.u32 %s144, %s145
      %p147 = scmp.eq.s32.totalorder %s146, 0
      %s149 = sadd.s32 %s148, 1
      %s150 = scalar_select %p147, %s148, %s149
      %p153 = pneg %p147
      %p154 = scmp.eq.s32.totalorder %s18, 1
      %p155 = por %p153, %p154
      %p156 = scmp.ne.s32.totalorder %s148, %s151
      %p157 = scmp.eq.s32.totalorder %s18, 0
      %p158 = por %p156, %p157
      %p159 = scmp.ne.s32.totalorder %s148, %s151
      %p160 = scmp.eq.s32.totalorder %s23, 1
      %p161 = por %p159, %p160
      %p162 = scmp.ne.s32.totalorder %s151, %s152
      %p163 = scmp.eq.s32.totalorder %s23, 0
      %p164 = por %p162, %p163
      %p165 = scmp.ne.s32.totalorder %s151, %s152
      %p166 = scmp.eq.s32.totalorder %s24, 1
      %p167 = por %p165, %p166
      %p169 = scmp.ne.s32.totalorder %s152, %s168
      %p170 = scmp.eq.s32.totalorder %s24, 0
      %p171 = por %p169, %p170
      %s172 = ssub.s32 %s25, %s37
      %s173 = ssub.s32 %s26, %s33
      %s174 = sor.u32 %s172, %s173
      %p175 = scmp.eq.s32.totalorder %s174, 0
      %s177 = sadd.s32 %s176, 1
      %s178 = scalar_select %p175, %s176, %s177
      %p181 = pneg %p175
      %p182 = scmp.eq.s32.totalorder %s18, 1
      %p183 = por %p181, %p182
      %p184 = scmp.ne.s32.totalorder %s176, %s179
      %p185 = scmp.eq.s32.totalorder %s18, 0
      %p186 = por %p184, %p185
      %p187 = scmp.ne.s32.totalorder %s176, %s179
      %p188 = scmp.eq.s32.totalorder %s23, 1
      %p189 = por %p187, %p188
      %p190 = scmp.ne.s32.totalorder %s179, %s180
      %p191 = scmp.eq.s32.totalorder %s23, 0
      %p192 = por %p190, %p191
      %p193 = scmp.ne.s32.totalorder %s179, %s180
      %p194 = scmp.eq.s32.totalorder %s24, 1
      %p195 = por %p193, %p194
      %p197 = scmp.ne.s32.totalorder %s180, %s196
      %p198 = scmp.eq.s32.totalorder %s24, 0
      %p199 = por %p197, %p198
      %p200 = scmp.le.s32.totalorder 1, %s18
      %p201 = scmp.lt.s32.totalorder %s18, 3
      %p202 = pnand %p200, %p201
      %p203 = pneg %p202
      // Predicated region
      $region9: #{tpu_custom_call.1} parent=5 // pred_check
        _
      $region10: #{tpu_custom_call.1} parent=5 // pred_check_branch
        %205 = sbr.rel (%p202) target = $region12
      $region11: #{tpu_custom_call.1} parent=5 // pred_region
        %s206 = ssub.s32 %s18, 1
        // Predicated region
        $region13: #{tpu_custom_call.1} parent=11 // pred_check
          %p207 = pneg %p56
        $region14: #{tpu_custom_call.1} parent=11 // pred_check_branch
          %209 = sbr.rel (%p207) target = $region16
        $region15: #{tpu_custom_call.1} parent=11 // pred_region
          %s210 = smul.u32 2, %s28
          %p211 = scmp.lt.s32.totalorder %s210, 1
          %s212 = scalar_select %p211, %s210, 1
          %s213 = smul.addr %s212, 2
          %s214 = scalar_lea.vmem %s0, %s213
          %s215 = smul.u32 2, %s28
        $region16: #{tpu_custom_call.1} parent=11 // pred_fallthru
          _
      $region12: #{tpu_custom_call.1} parent=5 // pred_fallthru
        _
      %p216 = scmp.lt.s32.totalorder %s18, 2
      // Predicated region
      $region17: #{tpu_custom_call.1} parent=5 // pred_check
        %p217 = pneg %p216
      $region18: #{tpu_custom_call.1} parent=5 // pred_check_branch
        %219 = sbr.rel (%p217) target = $region20
      $region19: #{tpu_custom_call.1} parent=5 // pred_region
        // Predicated region
        $region21: #{tpu_custom_call.1} parent=19 // pred_check
          %p220 = pneg %p76
        $region22: #{tpu_custom_call.1} parent=19 // pred_check_branch
          %222 = sbr.rel (%p220) target = $region24
        $region23: #{tpu_custom_call.1} parent=19 // pred_region
          %p223 = scmp.lt.s32.totalorder %s25, 1
          %s224 = scalar_select %p223, %s25, 1
          %s225 = smul.addr %s224, 3
          %s226 = smul.addr %s225, 4
          %s227 = scalar_lea.vmem %s1, %s226
        $region24: #{tpu_custom_call.1} parent=19 // pred_fallthru
          _
        // Predicated region
        $region25: #{tpu_custom_call.1} parent=19 // pred_check
          %p228 = pneg %p102
        $region26: #{tpu_custom_call.1} parent=19 // pred_check_branch
          %230 = sbr.rel (%p228) target = $region28
        $region27: #{tpu_custom_call.1} parent=19 // pred_region
          %p231 = scmp.lt.s32.totalorder %s25, 1
          %s232 = scalar_select %p231, %s25, 1
          %s233 = smul.addr %s232, 4
          %s234 = smul.addr %s233, 8
          %s235 = scalar_lea.vmem %s2, %s234
        $region28: #{tpu_custom_call.1} parent=19 // pred_fallthru
          _
      $region20: #{tpu_custom_call.1} parent=5 // pred_fallthru
        _
      %p236 = scmp.le.s32.totalorder 1, %s18
      %p237 = scmp.lt.s32.totalorder %s18, 3
      %p238 = pnand %p236, %p237
      %p239 = pneg %p238
      // Predicated region
      $region29: #{tpu_custom_call.1} parent=5 // pred_check
        _
      $region30: #{tpu_custom_call.1} parent=5 // pred_check_branch
        %241 = sbr.rel (%p238) target = $region32
      $region31: #{tpu_custom_call.1} parent=5 // pred_region
        %s242 = ssub.s32 %s18, 1
        %s243 = smul.u32 2, %s28
        %p244 = scmp.lt.s32.totalorder %s243, 1
        %s245 = scalar_select %p244, %s243, 1
        %s246 = smul.addr %s245, 2
        %s247 = scalar_lea.vmem %s0, %s246
        %p248 = pneg %p56
        %p249 = pneg %p53
        %p250 = scmp.lt.s32.totalorder %s27, 1
        %s251 = scalar_select %p250, %s27, 1
        %s252 = smul.addr %s251, 3
        %s253 = smul.addr %s252, 4
        %s254 = scalar_lea.vmem %s1, %s253
        %p255 = pneg %p82
        %p256 = pneg %p79
        %p257 = scmp.lt.s32.totalorder %s27, 1
        %s258 = scalar_select %p257, %s27, 1
        %s259 = smul.addr %s258, 4
        %s260 = smul.addr %s259, 8
        %s261 = scalar_lea.vmem %s2, %s260
        %p262 = pneg %p108
        %p263 = pneg %p105
        %p264 = pneg %p136
        %p265 = pneg %p133
        %s266 = sand.u32 %s123, 1
        %s267 = scalar_lea.sflag [#allocation3], %s266
        %s268 = sand.u32 %s123, 1
        %s269 = smul.addr %s268, 8
        %s270 = scalar_lea.vmem [#allocation2], %s269
        %p271 = pneg %p164
        %p272 = pneg %p161
        %s273 = sand.u32 %s23, 1
        %s274 = scalar_lea.sflag [#allocation5], %s273
        %s275 = sand.u32 %s151, 1
        %s276 = smul.addr %s275, 16
        %s277 = scalar_lea.vmem [#allocation4], %s276
        %p278 = pneg %p192
        %p279 = pneg %p189
        %s280 = sand.u32 %s23, 1
        %s281 = scalar_lea.sflag [#allocation5], %s280
        %s282 = sand.u32 %s179, 1
        %s283 = smul.addr %s282, 8
        %s284 = scalar_lea.vmem [#allocation6], %s283
        %s285 = smul.u32 2, %s28
        %p286 = scmp.lt.s32.totalorder %s285, 1
        %s287 = scalar_select %p286, %s285, 1
        %s288 = smul.addr %s287, 2
        %s289 = scalar_lea.vmem %s0, %s288
        %s290 = smul.u32 2, %s28
        %p291 = scmp.lt.s32.totalorder %s27, 1
        %s292 = scalar_select %p291, %s27, 1
        %s293 = smul.addr %s292, 3
        %s294 = smul.addr %s293, 4
        %s295 = scalar_lea.vmem %s1, %s294
        %p296 = scmp.lt.s32.totalorder %s27, 1
        %s297 = scalar_select %p296, %s27, 1
        %s298 = smul.addr %s297, 4
        %s299 = smul.addr %s298, 8
        %s300 = scalar_lea.vmem %s2, %s299
        %s301 = smul.u32 2, %s28
        %s302 = smul.u32 2, %s28
        %s303 = smul.u32 2, %s28
        %v304 = vld [vmem:[%s289] sm:$0xf]
        %v306 = vlaneseq
        %v307 = vshrl.u32 %v306, 7
        %v308 = vsub.s32 0, %v307
        %v309 = vrot.slane %v304, %v308
        %v310 = vlaneseq
        %v311 = vshrl.u32 %v310, 7
        %v312 = vsub.s32 2, %v311
        %v313 = vrot.slane %v304, %v312
        %v316 = vlaneseq
        %v317 = vshrl.u32 %v316, 7
        %v318 = vsub.s32 0, %v317
        %v319 = vrot.slane %v309, %v318
        %v320 = vlaneseq
        %v321 = vshrl.u32 %v320, 7
        %v322 = vsub.s32 0, %v321
        %v323 = vrot.slane %v313, %v322
        %v324 = vlaneseq
        %v325 = vshrl.u32 %v324, 7
        %v326 = vsub.s32 1, %v325
        %v327 = vrot.slane %v304, %v326
        %v328 = vlaneseq
        %v329 = vshrl.u32 %v328, 7
        %v330 = vsub.s32 3, %v329
        %v331 = vrot.slane %v304, %v330
        %v334 = vlaneseq
        %v335 = vshrl.u32 %v334, 7
        %v336 = vsub.s32 1, %v335
        %v337 = vrot.slane %v327, %v336
        %v338 = vlaneseq
        %v339 = vshrl.u32 %v338, 7
        %v340 = vsub.s32 1, %v339
        %v341 = vrot.slane %v331, %v340
        %v342 = vld [vmem:[%s295] sm:$0xf]
        %s343 = scalar_lea.vmem %s295, 4
        %v344 = vld [vmem:[%s343] sm:$0xf]
        %s345 = scalar_lea.vmem %s295, 8
        %v346 = vld [vmem:[%s345] sm:$0xf]
        %348 = vset.pattern.permute.xlu0 0
        %349 = vperm.xlu0 %348, %v342
        %v350 = vpop.permute.xlu0 %349
        %v352 = vsub.f32 %v319, %v350
        %v353 = vsub.f32 %v323, %v350
        %v354 = vmul.f32 %v352, %v352
        %v355 = vmul.f32 %v353, %v353
        %357 = vset.pattern.permute.xlu0 0
        %358 = vperm.xlu0 %357, %v344
        %v359 = vpop.permute.xlu0 %358
        %v361 = vsub.f32 %v337, %v359
        %v362 = vsub.f32 %v341, %v359
        %v363 = vmul.f32 %v361, %v361
        %v364 = vmul.f32 %v362, %v362
        %v365 = vadd.f32 %v354, %v363
        %v366 = vadd.f32 %v355, %v364
        %vm367 = vcmp.gt.f32.partialorder %v346, 0.0
        %v368 = vsel %vm367, 1, 0
        %369 = vset.pattern.permute.xlu0 0
        %370 = vperm.xlu0 %369, %v368
        %v371 = vpop.permute.xlu0 %370
        %vm372 = vcmp.eq.s32.totalorder %v371, 1
        %v373 = vsel %vm372, %v365, 1e+30
        %v374 = vsel %vm372, %v366, 1e+30
        %v375 = vmin.f32 %v373, 1e+30
        %v376 = vmin.f32 %v374, 1e+30
        %v377 = vmul.f32 %v375, -0.02
        %v378 = vmul.f32 %v376, -0.02
        %v379 = vmul.f32 %v377, 1.442695
        %v380 = vpow.pop %v379
        %v381 = vmul.f32 %v378, 1.442695
        %v382 = vpow.pop %v381
        %v385 = vcombine.low %v380, %v382
        %387 = vst [vmem:[%s270] sm:$0xff] %v385
        %v388 = vld [vmem:[%s300] sm:$0xff]
        %s389 = scalar_lea.vmem %s300, 8
        %v390 = vld [vmem:[%s389] sm:$0xff]
        %s391 = scalar_lea.vmem %s300, 16
        %v392 = vld [vmem:[%s391] sm:$0xff]
        %s393 = scalar_lea.vmem %s300, 24
        %v394 = vld [vmem:[%s393] sm:$0xff]
        %396 = vset.pattern.permute.xlu0 0
        %397 = vperm.xlu0 %396, %v388
        %v398 = vpop.permute.xlu0 %397
        %v400 = vsub.f32 %v319, %v398
        %v401 = vsub.f32 %v323, %v398
        %v402 = vmul.f32 %v400, %v400
        %v403 = vmul.f32 %v401, %v401
        %405 = vset.pattern.permute.xlu0 0
        %406 = vperm.xlu0 %405, %v390
        %v407 = vpop.permute.xlu0 %406
        %v409 = vsub.f32 %v337, %v407
        %v410 = vsub.f32 %v341, %v407
        %v411 = vmul.f32 %v409, %v409
        %v412 = vmul.f32 %v410, %v410
        %v413 = vadd.f32 %v402, %v411
        %v414 = vadd.f32 %v403, %v412
        %vm415 = vcmp.le.f32.partialorder %v413, 100.0
        %vm416 = vcmp.le.f32.partialorder %v414, 100.0
        %vm417 = vcmp.gt.f32.partialorder %v392, 0.0
        %v418 = vsel %vm417, 1, 0
        %419 = vset.pattern.permute.xlu0 0
        %420 = vperm.xlu0 %419, %v418
        %v421 = vpop.permute.xlu0 %420
        %vm422 = vcmp.eq.s32.totalorder %v421, 1
        %vm423 = vmand %vm415, %vm422
        %vm424 = vmand %vm416, %vm422
        %vm425 = vcmp.gt.f32.partialorder %v394, 0.0
        %v426 = vsub.f32 %v398, %v319
        %v427 = vsub.f32 %v398, %v323
        %v428 = vsub.f32 %v407, %v337
        %v429 = vsub.f32 %v407, %v341
        %v430 = vsel %vm425, 1, 0
        %431 = vset.pattern.permute.xlu0 0
        %432 = vperm.xlu0 %431, %v430
        %v433 = vpop.permute.xlu0 %432
        %vm434 = vcmp.eq.s32.totalorder %v433, 1
        %v435 = vsel %vm434, %v426, %v428
        %v436 = vsel %vm434, %v427, %v429
        %v437 = vmul.f32 %v435, 0.13736075
        %v438 = vmul.f32 %v436, 0.13736075
        %v439 = vsel %vm423, %v437, 0.0
        %v440 = vsel %vm424, %v438, 0.0
        %v441 = vsel %vm423, 1.0, 0.0
        %v442 = vsel %vm424, 1.0, 0.0
        %443 = vst [vmem:[%s277] sm:$0xff] %v439
        %444 = vst [vmem:[%s277 + $0x8] sm:$0xff] %v440
        %v445 = vpack.c.bf16 %v441, %v441
        %v446 = vpack.c.bf16 %v442, %v442
        %v449 = vunpack.c.l.b16 %v445
        %v450 = vunpack.c.l.b16 %v446
        %v451 = vpack.c.b16 %v450, %v449
        %453 = vst [vmem:[%s284] sm:$0xff] %v451
        %s454 = sand.u32 %s123, 1
        %s455 = scalar_lea.sflag [#allocation3], %s454
        %s456 = sand.u32 %s123, 1
        %s457 = smul.addr %s456, 8
        %s458 = scalar_lea.vmem [#allocation2], %s457
        %s459 = sand.u32 %s23, 1
        %s460 = scalar_lea.sflag [#allocation5], %s459
        %s461 = sand.u32 %s151, 1
        %s462 = smul.addr %s461, 16
        %s463 = scalar_lea.vmem [#allocation4], %s462
        %s464 = sand.u32 %s23, 1
        %s465 = scalar_lea.sflag [#allocation5], %s464
        %s466 = sand.u32 %s179, 1
        %s467 = smul.addr %s466, 8
        %s468 = scalar_lea.vmem [#allocation6], %s467
        // Predicated region
        $region33: #{tpu_custom_call.1} parent=31 // pred_check
          %p469 = pneg %p133
        $region34: #{tpu_custom_call.1} parent=31 // pred_check_branch
          %471 = sbr.rel (%p469) target = $region36
        $region35: #{tpu_custom_call.1} parent=31 // pred_region
          %s472 = smul.u32 2, %s28
          %s474 = ssub.s32 128, 128
          %475 = vsyncadd %s455, %s474
          %s476 = smul.addr %s27, 2
          %s477 = sadd.s32 %s472, %s476
          %s478 = smul.addr %s477, 64
          %s479 = scalar_lea.hbm %s3, %s478
          %s481 = sshll.u32 %s458, 4
          %s482 = int_to_ptr.vmem [resolvable:$true] %s481
          %484 = dma.vmem_to_hbm [thread:$0]  %s482, 128, %s479, %s455
        $region36: #{tpu_custom_call.1} parent=31 // pred_fallthru
          _
        // Predicated region
        $region37: #{tpu_custom_call.1} parent=31 // pred_check
          %p485 = pneg %p161
        $region38: #{tpu_custom_call.1} parent=31 // pred_check_branch
          %487 = sbr.rel (%p485) target = $region40
        $region39: #{tpu_custom_call.1} parent=31 // pred_region
          %s488 = smul.u32 2, %s28
          %s490 = ssub.s32 256, 256
          %491 = vsyncadd %s460, %s490
          %s492 = smul.addr %s27, 2
          %s493 = sadd.s32 %s488, %s492
          %s494 = smul.addr %s493, 128
          %s495 = scalar_lea.hbm %s4, %s494
          %s497 = sshll.u32 %s463, 4
          %s498 = int_to_ptr.vmem [resolvable:$true] %s497
          %500 = dma.vmem_to_hbm [thread:$0]  %s498, 256, %s495, %s460
        $region40: #{tpu_custom_call.1} parent=31 // pred_fallthru
          _
        // Predicated region
        $region41: #{tpu_custom_call.1} parent=31 // pred_check
          %p501 = pneg %p189
        $region42: #{tpu_custom_call.1} parent=31 // pred_check_branch
          %503 = sbr.rel (%p501) target = $region44
        $region43: #{tpu_custom_call.1} parent=31 // pred_region
          %s504 = smul.u32 2, %s28
          %s506 = ssub.s32 128, 128
          %507 = vsyncadd %s465, %s506
          %s508 = smul.addr %s27, 2
          %s509 = sadd.s32 %s504, %s508
          %s510 = smul.addr %s509, 64
          %s511 = scalar_lea.hbm %s5, %s510
          %s513 = sshll.u32 %s468, 4
          %s514 = int_to_ptr.vmem [resolvable:$true] %s513
          %516 = dma.vmem_to_hbm [thread:$0]  %s514, 128, %s511, %s465
        $region44: #{tpu_custom_call.1} parent=31 // pred_fallthru
          _
      $region32: #{tpu_custom_call.1} parent=5 // pred_fallthru
        _
      %p517 = scmp.le.s32.totalorder 2, %s18
      // Predicated region
      $region45: #{tpu_custom_call.1} parent=5 // pred_check
        %p518 = pneg %p517
      $region46: #{tpu_custom_call.1} parent=5 // pred_check_branch
        %520 = sbr.rel (%p518) target = $region48
      $region47: #{tpu_custom_call.1} parent=5 // pred_region
        %s521 = ssub.s32 %s18, 2
        // Predicated region
        $region49: #{tpu_custom_call.1} parent=47 // pred_check
          %p522 = pneg %p139
        $region50: #{tpu_custom_call.1} parent=47 // pred_check_branch
          %524 = sbr.rel (%p522) target = $region52
        $region51: #{tpu_custom_call.1} parent=47 // pred_region
          %s525 = sand.u32 %s124, 1
          %s526 = scalar_lea.sflag [#allocation3], %s525
          %s527 = sand.u32 %s124, 1
          %s528 = smul.addr %s527, 8
          %s529 = scalar_lea.vmem [#allocation2], %s528
          %530 = dma.done %s526, 128
        $region52: #{tpu_custom_call.1} parent=47 // pred_fallthru
          _
        // Predicated region
        $region53: #{tpu_custom_call.1} parent=47 // pred_check
          %p531 = pneg %p167
        $region54: #{tpu_custom_call.1} parent=47 // pred_check_branch
          %533 = sbr.rel (%p531) target = $region56
        $region55: #{tpu_custom_call.1} parent=47 // pred_region
          %s534 = sand.u32 %s24, 1
          %s535 = scalar_lea.sflag [#allocation5], %s534
          %s536 = sand.u32 %s152, 1
          %s537 = smul.addr %s536, 16
          %s538 = scalar_lea.vmem [#allocation4], %s537
          %539 = dma.done %s535, 256
        $region56: #{tpu_custom_call.1} parent=47 // pred_fallthru
          _
        // Predicated region
        $region57: #{tpu_custom_call.1} parent=47 // pred_check
          %p540 = pneg %p195
        $region58: #{tpu_custom_call.1} parent=47 // pred_check_branch
          %542 = sbr.rel (%p540) target = $region60
        $region59: #{tpu_custom_call.1} parent=47 // pred_region
          %s543 = sand.u32 %s24, 1
          %s544 = scalar_lea.sflag [#allocation5], %s543
          %s545 = sand.u32 %s180, 1
          %s546 = smul.addr %s545, 8
          %s547 = scalar_lea.vmem [#allocation6], %s546
          %548 = dma.done %s544, 128
        $region60: #{tpu_custom_call.1} parent=47 // pred_fallthru
          _
      $region48: #{tpu_custom_call.1} parent=5 // pred_fallthru
        _
    $region6: #{tpu_custom_call.1} parent=1 // loop_footer
      %s22 = sadd.s32 1, %s18
    $region7: #{tpu_custom_call.1} parent=1 // loop_footer_branch
      %17 = sbr.rel target = $region3
    $region8: #{tpu_custom_call.1} parent=1 // loop_exit
      _
    %549 = vsyncpa [#allocation3], 1
    %s550 = scalar_lea.sflag [#allocation3], 1
    %551 = vsyncpa %s550, 1
    %552 = vsyncpa [#allocation5], 1
    %s553 = scalar_lea.sflag [#allocation5], 1
    %554 = vsyncpa %s553, 1

</llo_original>
